<compile_context>
chip_gen: v5e
topology: v5e:2x2
jax: 0.10.0
libtpu: 0.0.40
codegen_flags: <defaults>
</compile_context>

<pallas_src>
import functools

import jax
import jax.numpy as jnp
from jax.experimental import pallas as pl
from jax.experimental.pallas import tpu as pltpu

STATE_DIM = 3
HIDDEN = 64


def _round_up(n: int, m: int) -> int:
    return ((n + m - 1) // m) * m


def _value_net_kernel(x_ref, w1t_ref, b1_ref, w2t_ref, b2_ref, w3_ref, b3_ref, o_ref):
    x = x_ref[...]          # (STATE_DIM, TB), batch mapped to lanes
    w1t = w1t_ref[...]      # (HIDDEN, STATE_DIM)

    # Layer 1: Linear(3, 64) + ReLU. K=3 contraction as 3 VPU broadcast FMAs
    # (an MXU matmul here would be >97% zero padding of the contraction depth).
    h1 = (w1t[:, 0:1] * x[0:1, :]
          + w1t[:, 1:2] * x[1:2, :]
          + w1t[:, 2:3] * x[2:3, :]
          + b1_ref[...])                                   # (HIDDEN, TB)
    h1 = jnp.maximum(h1, 0.0)

    # Layer 2: Linear(64, 64) + ReLU on the MXU, f32 accumulation.
    h2 = jnp.dot(w2t_ref[...], h1, preferred_element_type=jnp.float32)
    h2 = jnp.maximum(h2 + b2_ref[...], 0.0)                # (HIDDEN, TB)

    # Layer 3: Linear(64, 1). N=1 output -> VPU multiply + sublane reduction
    # instead of draining a 1/128-occupied MXU result FIFO.
    out = jnp.sum(h2 * w3_ref[...], axis=0, keepdims=True) + b3_ref[...]   # (1, TB)
    o_ref[...] = out.astype(o_ref.dtype)


@functools.partial(jax.jit, static_argnames=("tb_max",))
def value_network_forward(x, params, tb_max: int = 1024):
    """x: (B, STATE_DIM) float32 -> (B, 1) float32."""
    w1, b1, w2, b2, w3, b3 = params
    B = x.shape[0]

    # Batch tile: lane-dense (multiple of 128), capped at tb_max.
    TB = min(tb_max, _round_up(B, 128))
    Bp = _round_up(B, TB)
    n_tiles = Bp // TB

    # Feature-major, lane-dense input; zero-pad the batch axis (padded columns
    # produce garbage that is sliced off below).
    x_f = jnp.pad(x.T, ((0, 0), (0, Bp - B)))

    # Kernel-side parameter layout: W^T (out, in), biases as (out, 1) columns.
    w1t, w2t = w1.T, w2.T
    b1c, b2c, b3c = b1.T, b2.T, b3.T          # (64,1), (64,1), (1,1)
    w3c = w3                                   # (64, 1) already column-shaped

    const = lambda shape: pl.BlockSpec(shape, lambda i: (0, 0))

    out = pl.pallas_call(
        _value_net_kernel,
        out_shape=jax.ShapeDtypeStruct((1, Bp), jnp.float32),
        grid=(n_tiles,),
        in_specs=[
            pl.BlockSpec((STATE_DIM, TB), lambda i: (0, i)),   # x tile (pipelined)
            const((HIDDEN, STATE_DIM)),                        # W1^T (resident)
            const((HIDDEN, 1)),                                # b1
            const((HIDDEN, HIDDEN)),                           # W2^T
            const((HIDDEN, 1)),                                # b2
            const((HIDDEN, 1)),                                # w3
            const((1, 1)),                                     # b3
        ],
        out_specs=pl.BlockSpec((1, TB), lambda i: (0, i)),
        compiler_params=pltpu.CompilerParams(
            dimension_semantics=("parallel",)),                # 2-TC sharding on v7x
    )(x_f, w1t, b1c, w2t, b2c, w3c, b3c)

    return out[:, :B].T                                        # (B, 1)


def init_params(key):
    """Deterministic init mimicking PyTorch nn.Linear default (uniform +-1/sqrt(fan_in)).

    Weights stored (in_features, out_features); biases (1, out_features)."""
    ks = jax.random.split(key, 6)

    def linear(kw, kb, fan_in, fan_out):
        bound = 1.0 / jnp.sqrt(jnp.float32(fan_in))
        w = jax.random.uniform(kw, (fan_in, fan_out), jnp.float32, -bound, bound)
        b = jax.random.uniform(kb, (1, fan_out), jnp.float32, -bound, bound)
        return w, b

    w1, b1 = linear(ks[0], ks[1], STATE_DIM, HIDDEN)
    w2, b2 = linear(ks[2], ks[3], HIDDEN, HIDDEN)
    w3, b3 = linear(ks[4], ks[5], HIDDEN, 1)
    return (w1, b1, w2, b2, w3, b3)


def reference_forward(x, params):
    w1, b1, w2, b2, w3, b3 = params
    h1 = jnp.maximum(x @ w1 + b1, 0.0)
    h2 = jnp.maximum(h1 @ w2 + b2, 0.0)
    return h2 @ w3 + b3


if __name__ == "__main__":
    key = jax.random.PRNGKey(0)
    k_params, k_x1, k_x2 = jax.random.split(key, 3)

    params = init_params(k_params)

    # Small batch: single tile (batch padded 8 -> 128 lanes inside the wrapper).
    B1 = 8
    x1 = jax.random.normal(k_x1, (B1, STATE_DIM), jnp.float32)
    out1 = jax.block_until_ready(value_network_forward(x1, params))
    ref1 = reference_forward(x1, params)
    assert out1.shape == (B1, 1)
    assert jnp.allclose(out1, ref1, atol=1e-4, rtol=1e-4), "mismatch vs reference (B=8)"

    # Ragged batch exercising the grid: 3 tiles of 128 with padding on the last.
    B2 = 300
    x2 = jax.random.normal(k_x2, (B2, STATE_DIM), jnp.float32)
    out2 = jax.block_until_ready(value_network_forward(x2, params, tb_max=128))
    ref2 = reference_forward(x2, params)
    assert out2.shape == (B2, 1)
    assert jnp.allclose(out2, ref2, atol=1e-4, rtol=1e-4), "mismatch vs reference (B=300)"

    print("KERNEL_OK")
</pallas_src>

<mosaic_0001>
module attributes {stable_mosaic.version = 11 : i64} {
  func.func @_value_net_kernel(%arg0: i32, %arg1: memref<3x128xf32, #tpu.memory_space<vmem>>, %arg2: memref<64x3xf32, #tpu.memory_space<vmem>>, %arg3: memref<64x1xf32, #tpu.memory_space<vmem>>, %arg4: memref<64x64xf32, #tpu.memory_space<vmem>>, %arg5: memref<64x1xf32, #tpu.memory_space<vmem>>, %arg6: memref<64x1xf32, #tpu.memory_space<vmem>>, %arg7: memref<1x1xf32, #tpu.memory_space<vmem>>, %arg8: memref<1x128xf32, #tpu.memory_space<vmem>>) attributes {dimension_semantics = [#tpu.dimension_semantics<parallel>], iteration_bounds = array<i64: 1>, scalar_prefetch = 0 : i64, scratch_operands = 0 : i64, tpu.core_type = #tpu.core_type<tc>, window_params = [{transform_indices = @transform_0, window_bounds = array<i64: 3, 128>}, {pipeline_mode = #tpu.pipeline_mode<synchronous>, transform_indices = @transform_1, window_bounds = array<i64: 64, 3>}, {pipeline_mode = #tpu.pipeline_mode<synchronous>, transform_indices = @transform_2, window_bounds = array<i64: 64, 1>}, {pipeline_mode = #tpu.pipeline_mode<synchronous>, transform_indices = @transform_3, window_bounds = array<i64: 64, 64>}, {pipeline_mode = #tpu.pipeline_mode<synchronous>, transform_indices = @transform_4, window_bounds = array<i64: 64, 1>}, {pipeline_mode = #tpu.pipeline_mode<synchronous>, transform_indices = @transform_5, window_bounds = array<i64: 64, 1>}, {pipeline_mode = #tpu.pipeline_mode<synchronous>, transform_indices = @transform_6, window_bounds = array<i64: 1, 1>}, {transform_indices = @transform_7, window_bounds = array<i64: 1, 128>}]} {
    %c0 = arith.constant 0 : index
    %c0_0 = arith.constant 0 : index
    %0 = vector.load %arg1[%c0, %c0_0] : memref<3x128xf32, #tpu.memory_space<vmem>>, vector<3x128xf32>
    %c0_1 = arith.constant 0 : index
    %c0_2 = arith.constant 0 : index
    %1 = vector.load %arg2[%c0_1, %c0_2] : memref<64x3xf32, #tpu.memory_space<vmem>>, vector<64x3xf32>
    %2 = vector.extract_strided_slice %1 {offsets = [0, 0], sizes = [64, 1], strides = [1, 1]} : vector<64x3xf32> to vector<64x1xf32>
    %3 = vector.extract_strided_slice %0 {offsets = [0, 0], sizes = [1, 128], strides = [1, 1]} : vector<3x128xf32> to vector<1x128xf32>
    %4 = vector.broadcast %2 : vector<64x1xf32> to vector<64x128xf32>
    %5 = vector.broadcast %3 : vector<1x128xf32> to vector<64x128xf32>
    %6 = arith.mulf %4, %5 : vector<64x128xf32>
    %7 = vector.extract_strided_slice %1 {offsets = [0, 1], sizes = [64, 1], strides = [1, 1]} : vector<64x3xf32> to vector<64x1xf32>
    %8 = vector.extract_strided_slice %0 {offsets = [1, 0], sizes = [1, 128], strides = [1, 1]} : vector<3x128xf32> to vector<1x128xf32>
    %9 = vector.broadcast %7 : vector<64x1xf32> to vector<64x128xf32>
    %10 = vector.broadcast %8 : vector<1x128xf32> to vector<64x128xf32>
    %11 = arith.mulf %9, %10 : vector<64x128xf32>
    %12 = arith.addf %6, %11 : vector<64x128xf32>
    %13 = vector.extract_strided_slice %1 {offsets = [0, 2], sizes = [64, 1], strides = [1, 1]} : vector<64x3xf32> to vector<64x1xf32>
    %14 = vector.extract_strided_slice %0 {offsets = [2, 0], sizes = [1, 128], strides = [1, 1]} : vector<3x128xf32> to vector<1x128xf32>
    %15 = vector.broadcast %13 : vector<64x1xf32> to vector<64x128xf32>
    %16 = vector.broadcast %14 : vector<1x128xf32> to vector<64x128xf32>
    %17 = arith.mulf %15, %16 : vector<64x128xf32>
    %18 = arith.addf %12, %17 : vector<64x128xf32>
    %c0_3 = arith.constant 0 : index
    %c0_4 = arith.constant 0 : index
    %19 = vector.load %arg3[%c0_3, %c0_4] : memref<64x1xf32, #tpu.memory_space<vmem>>, vector<64x1xf32>
    %20 = vector.broadcast %19 : vector<64x1xf32> to vector<64x128xf32>
    %21 = arith.addf %18, %20 : vector<64x128xf32>
    %cst = arith.constant 0.000000e+00 : f32
    %22 = vector.broadcast %cst : f32 to vector<64x128xf32>
    %23 = arith.maximumf %21, %22 : vector<64x128xf32>
    %c0_5 = arith.constant 0 : index
    %c0_6 = arith.constant 0 : index
    %24 = vector.load %arg4[%c0_5, %c0_6] : memref<64x64xf32, #tpu.memory_space<vmem>>, vector<64x64xf32>
    %cst_7 = arith.constant dense<0.000000e+00> : vector<64x128xf32>
    %25 = tpu.matmul %24, %23, %cst_7 {dimension_numbers = #tpu.dot_dimension_numbers<[1], [0], [0], [1], [0, 0, 1, 1], [], []>} : vector<64x64xf32>, vector<64x128xf32>, vector<64x128xf32> -> vector<64x128xf32>
    %c0_8 = arith.constant 0 : index
    %c0_9 = arith.constant 0 : index
    %26 = vector.load %arg5[%c0_8, %c0_9] : memref<64x1xf32, #tpu.memory_space<vmem>>, vector<64x1xf32>
    %27 = vector.broadcast %26 : vector<64x1xf32> to vector<64x128xf32>
    %28 = arith.addf %25, %27 : vector<64x128xf32>
    %cst_10 = arith.constant 0.000000e+00 : f32
    %29 = vector.broadcast %cst_10 : f32 to vector<64x128xf32>
    %30 = arith.maximumf %28, %29 : vector<64x128xf32>
    %c0_11 = arith.constant 0 : index
    %c0_12 = arith.constant 0 : index
    %31 = vector.load %arg6[%c0_11, %c0_12] : memref<64x1xf32, #tpu.memory_space<vmem>>, vector<64x1xf32>
    %32 = vector.broadcast %31 : vector<64x1xf32> to vector<64x128xf32>
    %33 = arith.mulf %30, %32 : vector<64x128xf32>
    %cst_13 = arith.constant dense<0.000000e+00> : vector<128xf32>
    %34 = vector.multi_reduction <add>, %33, %cst_13 [0] : vector<64x128xf32> to vector<128xf32>
    %35 = vector.shape_cast %34 : vector<128xf32> to vector<1x128xf32>
    %c0_14 = arith.constant 0 : index
    %c0_15 = arith.constant 0 : index
    %36 = vector.load %arg7[%c0_14, %c0_15] : memref<1x1xf32, #tpu.memory_space<vmem>>, vector<1x1xf32>
    %37 = vector.broadcast %36 : vector<1x1xf32> to vector<1x128xf32>
    %38 = arith.addf %35, %37 : vector<1x128xf32>
    %c0_16 = arith.constant 0 : index
    %c0_17 = arith.constant 0 : index
    %39 = vector.load %arg8[%c0_16, %c0_17] : memref<1x128xf32, #tpu.memory_space<vmem>>, vector<1x128xf32>
    tpu.vector_store %arg8[%c0_16, %c0_17], %38 {strides = array<i32>} : memref<1x128xf32, #tpu.memory_space<vmem>>, vector<1x128xf32>,
    return
  }
  func.func @transform_0(%arg0: i32) -> (i32, i32) {
    %c0_i32 = arith.constant 0 : i32
    %c0_i32_0 = arith.constant 0 : i32
    return %c0_i32, %arg0 : i32, i32
  }
  func.func @transform_1(%arg0: i32) -> (i32, i32) {
    %c0_i32 = arith.constant 0 : i32
    %c0_i32_0 = arith.constant 0 : i32
    %c0_i32_1 = arith.constant 0 : i32
    return %c0_i32, %c0_i32_0 : i32, i32
  }
  func.func @transform_2(%arg0: i32) -> (i32, i32) {
    %c0_i32 = arith.constant 0 : i32
    %c0_i32_0 = arith.constant 0 : i32
    %c0_i32_1 = arith.constant 0 : i32
    return %c0_i32, %c0_i32_0 : i32, i32
  }
  func.func @transform_3(%arg0: i32) -> (i32, i32) {
    %c0_i32 = arith.constant 0 : i32
    %c0_i32_0 = arith.constant 0 : i32
    %c0_i32_1 = arith.constant 0 : i32
    return %c0_i32, %c0_i32_0 : i32, i32
  }
  func.func @transform_4(%arg0: i32) -> (i32, i32) {
    %c0_i32 = arith.constant 0 : i32
    %c0_i32_0 = arith.constant 0 : i32
    %c0_i32_1 = arith.constant 0 : i32
    return %c0_i32, %c0_i32_0 : i32, i32
  }
  func.func @transform_5(%arg0: i32) -> (i32, i32) {
    %c0_i32 = arith.constant 0 : i32
    %c0_i32_0 = arith.constant 0 : i32
    %c0_i32_1 = arith.constant 0 : i32
    return %c0_i32, %c0_i32_0 : i32, i32
  }
  func.func @transform_6(%arg0: i32) -> (i32, i32) {
    %c0_i32 = arith.constant 0 : i32
    %c0_i32_0 = arith.constant 0 : i32
    %c0_i32_1 = arith.constant 0 : i32
    return %c0_i32, %c0_i32_0 : i32, i32
  }
  func.func @transform_7(%arg0: i32) -> (i32, i32) {
    %c0_i32 = arith.constant 0 : i32
    %c0_i32_0 = arith.constant 0 : i32
    return %c0_i32, %arg0 : i32, i32
  }
}

</mosaic_0001>

<llo_original>
// kernel: value_network_forward.1
$region0: #{value_network_forward.1}
  #allocation0 [shape = 'u32[]', space=smem, size = 0x4, offset = 0x4, fixed_abs, tag = 'smem constant byte address 0x4 - core index']
  #allocation1 [shape = 'u32[72,128]{1,0:T(1,128)}', space=vmem, size = 0x9000, scoped, tag = 'internal scratch']
  #allocation2 [shape = 'f32[1,1]{1,0:T(1,128)S(1)}', space=vmem, size = 0x200, scoped, tag = 'scoped memory for value_network_forward.1']
  %s0 = inlined_call_operand.vmem [shape: f32[3,128], index: 0, kind: input, shape index: {}]
  %s1 = inlined_call_operand.vmem [shape: f32[64,3], index: 1, kind: input, shape index: {}]
  %s2 = inlined_call_operand.vmem [shape: f32[64,1], index: 2, kind: input, shape index: {}]
  %s3 = inlined_call_operand.vmem [shape: f32[64,64], index: 3, kind: input, shape index: {}]
  %s4 = inlined_call_operand.vmem [shape: f32[64,1], index: 4, kind: input, shape index: {}]
  %s5 = inlined_call_operand.vmem [shape: f32[64,1], index: 5, kind: input, shape index: {}]
  %s6 = inlined_call_operand.<no memory space> [shape: f32[1,1], index: 6, kind: input, shape index: {}]
  %s7 = inlined_call_operand.vmem [shape: f32[1,128], index: 7, kind: output, shape index: {}]
  %s8 = sld [smem:[#allocation0]]
  $region38: #{value_network_forward.1} parent=0
    _
  %s10 = ssub.s32 1, %s8
  %s11 = scalar_select 0, %s10, %s8
  %v12 = vstv %s6
  %13 = vst [vmem:[#allocation2] sm:$0x1] %v12
  // Predicated region
  $region2: #{value_network_forward.1} parent=0 // pred_check
    _
  $region3: #{value_network_forward.1} parent=0 // pred_check_branch
    %15 = sbr.rel (0) target = $region5
  $region4: #{value_network_forward.1} parent=0 // pred_region
    _
  $region5: #{value_network_forward.1} parent=0 // pred_fallthru
    _
  // Predicated region
  $region6: #{value_network_forward.1} parent=0 // pred_check
    _
  $region7: #{value_network_forward.1} parent=0 // pred_check_branch
    %17 = sbr.rel (0) target = $region9
  $region8: #{value_network_forward.1} parent=0 // pred_region
    _
  $region9: #{value_network_forward.1} parent=0 // pred_fallthru
    _
  // Predicated region
  $region10: #{value_network_forward.1} parent=0 // pred_check
    _
  $region11: #{value_network_forward.1} parent=0 // pred_check_branch
    %19 = sbr.rel (0) target = $region13
  $region12: #{value_network_forward.1} parent=0 // pred_region
    _
  $region13: #{value_network_forward.1} parent=0 // pred_fallthru
    _
  // Predicated region
  $region14: #{value_network_forward.1} parent=0 // pred_check
    _
  $region15: #{value_network_forward.1} parent=0 // pred_check_branch
    %21 = sbr.rel (0) target = $region17
  $region16: #{value_network_forward.1} parent=0 // pred_region
    _
  $region17: #{value_network_forward.1} parent=0 // pred_fallthru
    _
  // Predicated region
  $region18: #{value_network_forward.1} parent=0 // pred_check
    _
  $region19: #{value_network_forward.1} parent=0 // pred_check_branch
    %23 = sbr.rel (0) target = $region21
  $region20: #{value_network_forward.1} parent=0 // pred_region
    _
  $region21: #{value_network_forward.1} parent=0 // pred_fallthru
    _
  // Predicated region
  $region22: #{value_network_forward.1} parent=0 // pred_check
    _
  $region23: #{value_network_forward.1} parent=0 // pred_check_branch
    %25 = sbr.rel (0) target = $region25
  $region24: #{value_network_forward.1} parent=0 // pred_region
    _
  $region25: #{value_network_forward.1} parent=0 // pred_fallthru
    _
  // Predicated region
  $region26: #{value_network_forward.1} parent=0 // pred_check
    _
  $region27: #{value_network_forward.1} parent=0 // pred_check_branch
    %27 = sbr.rel (0) target = $region29
  $region28: #{value_network_forward.1} parent=0 // pred_region
    _
  $region29: #{value_network_forward.1} parent=0 // pred_fallthru
    _
  %v28 = vld [vmem:[%s0] sm:$0x7]
  %v29 = vld [vmem:[%s1] sm:$0xff]
  %v30 = vld [vmem:[%s1 + $0x8] sm:$0xff]
  %v31 = vld [vmem:[%s1 + $0x10] sm:$0xff]
  %v32 = vld [vmem:[%s1 + $0x18] sm:$0xff]
  %v33 = vld [vmem:[%s1 + $0x20] sm:$0xff]
  %v34 = vld [vmem:[%s1 + $0x28] sm:$0xff]
  %v35 = vld [vmem:[%s1 + $0x30] sm:$0xff]
  %v36 = vld [vmem:[%s1 + $0x38] sm:$0xff]
  %38 = vset.pattern.permute.xlu0 0
  %39 = vperm.xlu0 %38, %v29
  %v40 = vpop.permute.xlu0 %39
  %43 = vset.pattern.permute.xlu0 0
  %44 = vperm.xlu0 %43, %v30
  %v45 = vpop.permute.xlu0 %44
  %48 = vset.pattern.permute.xlu0 0
  %49 = vperm.xlu0 %48, %v31
  %v50 = vpop.permute.xlu0 %49
  %53 = vset.pattern.permute.xlu0 0
  %54 = vperm.xlu0 %53, %v32
  %v55 = vpop.permute.xlu0 %54
  %58 = vset.pattern.permute.xlu0 0
  %59 = vperm.xlu0 %58, %v33
  %v60 = vpop.permute.xlu0 %59
  %63 = vset.pattern.permute.xlu0 0
  %64 = vperm.xlu0 %63, %v34
  %v65 = vpop.permute.xlu0 %64
  %68 = vset.pattern.permute.xlu0 0
  %69 = vperm.xlu0 %68, %v35
  %v70 = vpop.permute.xlu0 %69
  %73 = vset.pattern.permute.xlu0 0
  %74 = vperm.xlu0 %73, %v36
  %v75 = vpop.permute.xlu0 %74
  %v77 = vperm.slane %v28, 0
  %v78 = vmul.f32 %v40, %v77
  %v79 = vmul.f32 %v45, %v77
  %v80 = vmul.f32 %v50, %v77
  %v81 = vmul.f32 %v55, %v77
  %v82 = vmul.f32 %v60, %v77
  %v83 = vmul.f32 %v65, %v77
  %v84 = vmul.f32 %v70, %v77
  %v85 = vmul.f32 %v75, %v77
  %86 = vset.pattern.permute.xlu0 1
  %87 = vperm.xlu0 %86, %v29
  %v88 = vpop.permute.xlu0 %87
  %90 = vset.pattern.permute.xlu0 1
  %91 = vperm.xlu0 %90, %v30
  %v92 = vpop.permute.xlu0 %91
  %94 = vset.pattern.permute.xlu0 1
  %95 = vperm.xlu0 %94, %v31
  %v96 = vpop.permute.xlu0 %95
  %98 = vset.pattern.permute.xlu0 1
  %99 = vperm.xlu0 %98, %v32
  %v100 = vpop.permute.xlu0 %99
  %102 = vset.pattern.permute.xlu0 1
  %103 = vperm.xlu0 %102, %v33
  %v104 = vpop.permute.xlu0 %103
  %106 = vset.pattern.permute.xlu0 1
  %107 = vperm.xlu0 %106, %v34
  %v108 = vpop.permute.xlu0 %107
  %110 = vset.pattern.permute.xlu0 1
  %111 = vperm.xlu0 %110, %v35
  %v112 = vpop.permute.xlu0 %111
  %114 = vset.pattern.permute.xlu0 1
  %115 = vperm.xlu0 %114, %v36
  %v116 = vpop.permute.xlu0 %115
  %v118 = vperm.slane %v28, 1
  %v119 = vmul.f32 %v88, %v118
  %v120 = vmul.f32 %v92, %v118
  %v121 = vmul.f32 %v96, %v118
  %v122 = vmul.f32 %v100, %v118
  %v123 = vmul.f32 %v104, %v118
  %v124 = vmul.f32 %v108, %v118
  %v125 = vmul.f32 %v112, %v118
  %v126 = vmul.f32 %v116, %v118
  %v127 = vadd.f32 %v78, %v119
  %v128 = vadd.f32 %v79, %v120
  %v129 = vadd.f32 %v80, %v121
  %v130 = vadd.f32 %v81, %v122
  %v131 = vadd.f32 %v82, %v123
  %v132 = vadd.f32 %v83, %v124
  %v133 = vadd.f32 %v84, %v125
  %v134 = vadd.f32 %v85, %v126
  %135 = vset.pattern.permute.xlu0 2
  %136 = vperm.xlu0 %135, %v29
  %v137 = vpop.permute.xlu0 %136
  %139 = vset.pattern.permute.xlu0 2
  %140 = vperm.xlu0 %139, %v30
  %v141 = vpop.permute.xlu0 %140
  %143 = vset.pattern.permute.xlu0 2
  %144 = vperm.xlu0 %143, %v31
  %v145 = vpop.permute.xlu0 %144
  %147 = vset.pattern.permute.xlu0 2
  %148 = vperm.xlu0 %147, %v32
  %v149 = vpop.permute.xlu0 %148
  %151 = vset.pattern.permute.xlu0 2
  %152 = vperm.xlu0 %151, %v33
  %v153 = vpop.permute.xlu0 %152
  %155 = vset.pattern.permute.xlu0 2
  %156 = vperm.xlu0 %155, %v34
  %v157 = vpop.permute.xlu0 %156
  %159 = vset.pattern.permute.xlu0 2
  %160 = vperm.xlu0 %159, %v35
  %v161 = vpop.permute.xlu0 %160
  %163 = vset.pattern.permute.xlu0 2
  %164 = vperm.xlu0 %163, %v36
  %v165 = vpop.permute.xlu0 %164
  %v167 = vperm.slane %v28, 2
  %v168 = vmul.f32 %v137, %v167
  %v169 = vmul.f32 %v141, %v167
  %v170 = vmul.f32 %v145, %v167
  %v171 = vmul.f32 %v149, %v167
  %v172 = vmul.f32 %v153, %v167
  %v173 = vmul.f32 %v157, %v167
  %v174 = vmul.f32 %v161, %v167
  %v175 = vmul.f32 %v165, %v167
  %v176 = vadd.f32 %v127, %v168
  %v177 = vadd.f32 %v128, %v169
  %v178 = vadd.f32 %v129, %v170
  %v179 = vadd.f32 %v130, %v171
  %v180 = vadd.f32 %v131, %v172
  %v181 = vadd.f32 %v132, %v173
  %v182 = vadd.f32 %v133, %v174
  %v183 = vadd.f32 %v134, %v175
  %v184 = vld [vmem:[%s2] sm:$0xff]
  %v185 = vld [vmem:[%s2 + $0x8] sm:$0xff]
  %v186 = vld [vmem:[%s2 + $0x10] sm:$0xff]
  %v187 = vld [vmem:[%s2 + $0x18] sm:$0xff]
  %v188 = vld [vmem:[%s2 + $0x20] sm:$0xff]
  %v189 = vld [vmem:[%s2 + $0x28] sm:$0xff]
  %v190 = vld [vmem:[%s2 + $0x30] sm:$0xff]
  %v191 = vld [vmem:[%s2 + $0x38] sm:$0xff]
  %193 = vset.pattern.permute.xlu0 0
  %194 = vperm.xlu0 %193, %v184
  %v195 = vpop.permute.xlu0 %194
  %198 = vset.pattern.permute.xlu0 0
  %199 = vperm.xlu0 %198, %v185
  %v200 = vpop.permute.xlu0 %199
  %203 = vset.pattern.permute.xlu0 0
  %204 = vperm.xlu0 %203, %v186
  %v205 = vpop.permute.xlu0 %204
  %208 = vset.pattern.permute.xlu0 0
  %209 = vperm.xlu0 %208, %v187
  %v210 = vpop.permute.xlu0 %209
  %213 = vset.pattern.permute.xlu0 0
  %214 = vperm.xlu0 %213, %v188
  %v215 = vpop.permute.xlu0 %214
  %218 = vset.pattern.permute.xlu0 0
  %219 = vperm.xlu0 %218, %v189
  %v220 = vpop.permute.xlu0 %219
  %223 = vset.pattern.permute.xlu0 0
  %224 = vperm.xlu0 %223, %v190
  %v225 = vpop.permute.xlu0 %224
  %228 = vset.pattern.permute.xlu0 0
  %229 = vperm.xlu0 %228, %v191
  %v230 = vpop.permute.xlu0 %229
  %v232 = vadd.f32 %v176, %v195
  %v233 = vadd.f32 %v177, %v200
  %v234 = vadd.f32 %v178, %v205
  %v235 = vadd.f32 %v179, %v210
  %v236 = vadd.f32 %v180, %v215
  %v237 = vadd.f32 %v181, %v220
  %v238 = vadd.f32 %v182, %v225
  %v239 = vadd.f32 %v183, %v230
  %v240 = vmax.f32 %v232, 0.0
  %v241 = vmax.f32 %v233, 0.0
  %v242 = vmax.f32 %v234, 0.0
  %v243 = vmax.f32 %v235, 0.0
  %v244 = vmax.f32 %v236, 0.0
  %v245 = vmax.f32 %v237, 0.0
  %v246 = vmax.f32 %v238, 0.0
  %v247 = vmax.f32 %v239, 0.0
  %v248 = vld [vmem:[%s3] sm:$0xff]
  %v249 = vld [vmem:[%s3 + $0x8] sm:$0xff]
  %v250 = vld [vmem:[%s3 + $0x10] sm:$0xff]
  %v251 = vld [vmem:[%s3 + $0x18] sm:$0xff]
  %v252 = vld [vmem:[%s3 + $0x20] sm:$0xff]
  %v253 = vld [vmem:[%s3 + $0x28] sm:$0xff]
  %v254 = vld [vmem:[%s3 + $0x30] sm:$0xff]
  %v255 = vld [vmem:[%s3 + $0x38] sm:$0xff]
  %v256 = vld [vmem:[%s4] sm:$0xff]
  %v257 = vld [vmem:[%s4 + $0x8] sm:$0xff]
  %v258 = vld [vmem:[%s4 + $0x10] sm:$0xff]
  %v259 = vld [vmem:[%s4 + $0x18] sm:$0xff]
  %v260 = vld [vmem:[%s4 + $0x20] sm:$0xff]
  %v261 = vld [vmem:[%s4 + $0x28] sm:$0xff]
  %v262 = vld [vmem:[%s4 + $0x30] sm:$0xff]
  %v263 = vld [vmem:[%s4 + $0x38] sm:$0xff]
  %265 = vset.pattern.permute.xlu0 0
  %266 = vperm.xlu0 %265, %v256
  %v267 = vpop.permute.xlu0 %266
  %270 = vset.pattern.permute.xlu0 0
  %271 = vperm.xlu0 %270, %v257
  %v272 = vpop.permute.xlu0 %271
  %275 = vset.pattern.permute.xlu0 0
  %276 = vperm.xlu0 %275, %v258
  %v277 = vpop.permute.xlu0 %276
  %280 = vset.pattern.permute.xlu0 0
  %281 = vperm.xlu0 %280, %v259
  %v282 = vpop.permute.xlu0 %281
  %285 = vset.pattern.permute.xlu0 0
  %286 = vperm.xlu0 %285, %v260
  %v287 = vpop.permute.xlu0 %286
  %290 = vset.pattern.permute.xlu0 0
  %291 = vperm.xlu0 %290, %v261
  %v292 = vpop.permute.xlu0 %291
  %295 = vset.pattern.permute.xlu0 0
  %296 = vperm.xlu0 %295, %v262
  %v297 = vpop.permute.xlu0 %296
  %300 = vset.pattern.permute.xlu0 0
  %301 = vperm.xlu0 %300, %v263
  %v302 = vpop.permute.xlu0 %301
  %vm304 = vcmask 523264
  %v306 = vsel %vm304, %v248, 0
  %v309 = vsel %vm304, %v249, 0
  %v312 = vsel %vm304, %v250, 0
  %v315 = vsel %vm304, %v251, 0
  %v318 = vsel %vm304, %v252, 0
  %v321 = vsel %vm304, %v253, 0
  %v324 = vsel %vm304, %v254, 0
  %v327 = vsel %vm304, %v255, 0
  %329 = vmatpush.msra.mxu0 0.0
  %330 = vmatpush.msra.mxu0 0.0
  %331 = vmatpush.msra.mxu0 0.0
  %332 = vmatpush.msra.mxu0 0.0
  %333 = vmatpush.msra.mxu0 0.0
  %334 = vmatpush.msra.mxu0 0.0
  %335 = vmatpush.msra.mxu0 0.0
  %336 = vmatpush.msra.mxu0 0.0
  %337 = vmatpush.msra.mxu0 %v247
  %338 = vmatpush.msra.mxu0 %v246
  %339 = vmatpush.msra.mxu0 %v245
  %340 = vmatpush.msra.mxu0 %v244
  %341 = vmatpush.msra.mxu0 %v243
  %342 = vmatpush.msra.mxu0 %v242
  %343 = vmatpush.msra.mxu0 %v241
  %344 = vmatpush.msra.mxu0 %v240
  %345 = vmatmul.f32.gmra.mxu0 %v306
  %v346 = vpop.f32.mrf.mxu0
  %v347 = vadd.f32 %v267, %v346
  %348 = vmatmul.f32.gmra.mxu0 %v309
  %v349 = vpop.f32.mrf.mxu0
  %v350 = vadd.f32 %v272, %v349
  %351 = vmatmul.f32.gmra.mxu0 %v312
  %v352 = vpop.f32.mrf.mxu0
  %v353 = vadd.f32 %v277, %v352
  %354 = vmatmul.f32.gmra.mxu0 %v315
  %v355 = vpop.f32.mrf.mxu0
  %v356 = vadd.f32 %v282, %v355
  %357 = vmatmul.f32.gmra.mxu0 %v318
  %v358 = vpop.f32.mrf.mxu0
  %v359 = vadd.f32 %v287, %v358
  %360 = vmatmul.f32.gmra.mxu0 %v321
  %v361 = vpop.f32.mrf.mxu0
  %v362 = vadd.f32 %v292, %v361
  %363 = vmatmul.f32.gmra.mxu0 %v324
  %v364 = vpop.f32.mrf.mxu0
  %v365 = vadd.f32 %v297, %v364
  %366 = vmatmul.f32.gmra.mxu0 %v327
  %v367 = vpop.f32.mrf.mxu0
  %v368 = vadd.f32 %v302, %v367
  %369 = vdwg.mxu0
  %v370 = vmax.f32 %v347, 0.0
  %v371 = vmax.f32 %v350, 0.0
  %v372 = vmax.f32 %v353, 0.0
  %v373 = vmax.f32 %v356, 0.0
  %v374 = vmax.f32 %v359, 0.0
  %v375 = vmax.f32 %v362, 0.0
  %v376 = vmax.f32 %v365, 0.0
  %v377 = vmax.f32 %v368, 0.0
  %v378 = vld [vmem:[%s5] sm:$0xff]
  %v379 = vld [vmem:[%s5 + $0x8] sm:$0xff]
  %v380 = vld [vmem:[%s5 + $0x10] sm:$0xff]
  %v381 = vld [vmem:[%s5 + $0x18] sm:$0xff]
  %v382 = vld [vmem:[%s5 + $0x20] sm:$0xff]
  %v383 = vld [vmem:[%s5 + $0x28] sm:$0xff]
  %v384 = vld [vmem:[%s5 + $0x30] sm:$0xff]
  %v385 = vld [vmem:[%s5 + $0x38] sm:$0xff]
  %387 = vset.pattern.permute.xlu0 0
  %388 = vperm.xlu0 %387, %v378
  %v389 = vpop.permute.xlu0 %388
  %392 = vset.pattern.permute.xlu0 0
  %393 = vperm.xlu0 %392, %v379
  %v394 = vpop.permute.xlu0 %393
  %397 = vset.pattern.permute.xlu0 0
  %398 = vperm.xlu0 %397, %v380
  %v399 = vpop.permute.xlu0 %398
  %402 = vset.pattern.permute.xlu0 0
  %403 = vperm.xlu0 %402, %v381
  %v404 = vpop.permute.xlu0 %403
  %407 = vset.pattern.permute.xlu0 0
  %408 = vperm.xlu0 %407, %v382
  %v409 = vpop.permute.xlu0 %408
  %412 = vset.pattern.permute.xlu0 0
  %413 = vperm.xlu0 %412, %v383
  %v414 = vpop.permute.xlu0 %413
  %417 = vset.pattern.permute.xlu0 0
  %418 = vperm.xlu0 %417, %v384
  %v419 = vpop.permute.xlu0 %418
  %422 = vset.pattern.permute.xlu0 0
  %423 = vperm.xlu0 %422, %v385
  %v424 = vpop.permute.xlu0 %423
  %v426 = vmul.f32 %v370, %v389
  %v427 = vmul.f32 %v371, %v394
  %v428 = vmul.f32 %v372, %v399
  %v429 = vmul.f32 %v373, %v404
  %v430 = vmul.f32 %v374, %v409
  %v431 = vmul.f32 %v375, %v414
  %v432 = vmul.f32 %v376, %v419
  %v433 = vmul.f32 %v377, %v424
  %v434 = vadd.f32 %v426, %v427
  %v435 = vadd.f32 %v434, %v428
  %v436 = vadd.f32 %v435, %v429
  %v437 = vadd.f32 %v436, %v430
  %v438 = vadd.f32 %v437, %v431
  %v439 = vadd.f32 %v438, %v432
  %v440 = vadd.f32 %v439, %v433
  %v441 = vrot.slane %v440, 4
  %v442 = vadd.f32 %v440, %v441
  %v443 = vrot.slane %v442, 2
  %v444 = vadd.f32 %v442, %v443
  %v445 = vrot.slane %v444, 1
  %v446 = vadd.f32 %v444, %v445
  %v447 = vld [vmem:[#allocation2] sm:$0x1]
  %449 = vset.pattern.permute.xlu0 0
  %450 = vperm.xlu0 %449, %v447
  %v451 = vpop.permute.xlu0 %450
  %v453 = vperm.slane %v451, 0
  %v454 = vadd.f32 %v446, %v453
  %455 = vst [vmem:[%s7] sm:$0x1] %v454
  // Predicated region
  $region30: #{value_network_forward.1} parent=0 // pred_check
    _
  $region31: #{value_network_forward.1} parent=0 // pred_check_branch
    %457 = sbr.rel (0) target = $region33
  $region32: #{value_network_forward.1} parent=0 // pred_region
    _
  $region33: #{value_network_forward.1} parent=0 // pred_fallthru
    _
  // Predicated region
  $region34: #{value_network_forward.1} parent=0 // pred_check
    _
  $region35: #{value_network_forward.1} parent=0 // pred_check_branch
    %459 = sbr.rel (0) target = $region37
  $region36: #{value_network_forward.1} parent=0 // pred_region
    _
  $region37: #{value_network_forward.1} parent=0 // pred_fallthru
    _

</llo_original>
